<compile_context>
chip_gen: v7x
topology: tpu7x:2x2x1
jax: 0.10.0
libtpu: 0.0.40
codegen_flags: <defaults>
</compile_context>

<pallas_src>
import jax
import jax.numpy as jnp
from jax import lax
from jax.experimental import pallas as pl
from jax.experimental.pallas import tpu as pltpu

LANE = 128
MAX_BLOCK_ROWS = 2048  # 2048 * 128 * 4B = 1 MiB per f32 input block


def _make_nmse_kernel(block_rows, rows_total, steps, needs_mask):
    """Builds the reduction kernel specialized on static tiling parameters."""

    def kernel(yt_ref, yp_ref, ssd_ref, sst_ref):
        p = pl.program_id(0)          # parallel (per-TensorCore) axis
        s = pl.program_id(1)          # reduction axis (last in grid)

        @pl.when(s == 0)
        def _():
            ssd_ref[...] = jnp.zeros_like(ssd_ref)
            sst_ref[...] = jnp.zeros_like(sst_ref)

        yt = yt_ref[...].astype(jnp.float32)
        yp = yp_ref[...].astype(jnp.float32)
        d = yt - yp
        sq_d = d * d
        sq_t = yt * yt

        if needs_mask:
            # Zero out rows past the true end of the array (ragged last block
            # and/or a phantom block when n_par * steps > num_blocks).
            logical_block = p * steps + s
            row0 = logical_block * block_rows
            row_ids = lax.broadcasted_iota(jnp.int32, (block_rows, LANE), 0) + row0
            valid = row_ids < rows_total
            sq_d = jnp.where(valid, sq_d, 0.0)
            sq_t = jnp.where(valid, sq_t, 0.0)

        if block_rows % 8 == 0:
            # Fold the block onto an (8, 128) vreg-shaped accumulator with pure
            # VPU adds (no cross-lane reduction in the inner loop).
            k = block_rows // 8
            ssd_ref[...] += sq_d.reshape(k, 8, LANE).sum(axis=0)
            sst_ref[...] += sq_t.reshape(k, 8, LANE).sum(axis=0)
        else:
            # Tiny single-block inputs only: plain sublane reduce into row 0.
            ssd_ref[0:1, :] += sq_d.sum(axis=0, keepdims=True)
            sst_ref[0:1, :] += sq_t.sum(axis=0, keepdims=True)

    return kernel


def _reduce_sums(y_true, y_pred):
    """Pallas reduction: returns (sum((yt-yp)^2), sum(yt^2)) as f32 scalars."""
    n = y_true.size
    ft = jnp.ravel(y_true)  # free reshape of a contiguous array; native dtype
    fp = jnp.ravel(y_pred)

    rem = n % LANE
    if rem:
        # Rare non-lane-aligned case: pad the tail (<= 127 zeros, contribute 0).
        pad = LANE - rem
        ft = jnp.concatenate([ft, jnp.zeros((pad,), ft.dtype)])
        fp = jnp.concatenate([fp, jnp.zeros((pad,), fp.dtype)])

    rows = ft.size // LANE
    ft2 = ft.reshape(rows, LANE)   # free: splits the minor-most contiguous axis
    fp2 = fp.reshape(rows, LANE)

    block_rows = rows if rows <= MAX_BLOCK_ROWS else MAX_BLOCK_ROWS
    num_blocks = pl.cdiv(rows, block_rows)
    # Split blocks across (up to) two TensorCores (v7x megacore). On single-TC
    # chips the parallel axis is just an outer loop with negligible overhead.
    n_par = 2 if num_blocks >= 2 else 1
    steps = pl.cdiv(num_blocks, n_par)
    needs_mask = (rows % block_rows != 0) or (n_par * steps != num_blocks)

    def in_map(p, s):
        # Clamp so a phantom trailing block (when n_par*steps > num_blocks)
        # re-reads the last valid block; its contribution is masked to zero.
        return (jnp.minimum(p * steps + s, num_blocks - 1), 0)

    def out_map(p, s):
        return (p, 0, 0)

    ssd_parts, sst_parts = pl.pallas_call(
        _make_nmse_kernel(block_rows, rows, steps, needs_mask),
        out_shape=(
            jax.ShapeDtypeStruct((n_par, 8, LANE), jnp.float32),
            jax.ShapeDtypeStruct((n_par, 8, LANE), jnp.float32),
        ),
        grid_spec=pltpu.PrefetchScalarGridSpec(
            num_scalar_prefetch=0,
            grid=(n_par, steps),
            in_specs=[
                pl.BlockSpec((block_rows, LANE), in_map),
                pl.BlockSpec((block_rows, LANE), in_map),
            ],
            out_specs=[
                pl.BlockSpec((None, 8, LANE), out_map),
                pl.BlockSpec((None, 8, LANE), out_map),
            ],
        ),
        compiler_params=pltpu.CompilerParams(
            dimension_semantics=("parallel", "arbitrary"),
        ),
    )(ft2, fp2)

    return jnp.sum(ssd_parts), jnp.sum(sst_parts)


def normalized_mse_loss(y_true, y_pred, std=None):
    """JAX/Pallas equivalent of NormalizedMSELoss.forward(y_true, y_pred)."""
    n = y_true.size
    if n == 0:
        # nn.MSELoss on empty input yields NaN; mirror that without a 0-size grid.
        return jnp.float32(jnp.nan)
    ssd, sst = _reduce_sums(y_true, y_pred)
    nf = jnp.float32(n)
    mse = ssd / nf
    if std is not None:
        var = jnp.float32(std) ** 2
    else:
        var = sst / nf
    return mse / var


if __name__ == "__main__":
    key = jax.random.PRNGKey(0)
    k1, k2 = jax.random.split(key)

    # Small NCHW-style inputs consistent with typical usage of this loss.
    y_true = jax.random.normal(k1, (2, 4, 16, 16), dtype=jnp.float32)
    y_pred = jax.random.normal(k2, (2, 4, 16, 16), dtype=jnp.float32)

    # std=None path (normalize by mean(y_true**2))
    loss = jax.block_until_ready(normalized_mse_loss(y_true, y_pred, std=None))
    # std-given path
    loss_std = jax.block_until_ready(normalized_mse_loss(y_true, y_pred, std=0.5))

    ref_mse = jnp.mean((y_true - y_pred) ** 2)
    ref = ref_mse / jnp.mean(y_true ** 2)
    ref_std = ref_mse / jnp.float32(0.5 ** 2)
    assert jnp.allclose(loss, ref, rtol=1e-5, atol=1e-6), (loss, ref)
    assert jnp.allclose(loss_std, ref_std, rtol=1e-5, atol=1e-6), (loss_std, ref_std)

    # bf16 inputs exercise the native-dtype streaming path (cast happens in-kernel).
    yt_bf = y_true.astype(jnp.bfloat16)
    yp_bf = y_pred.astype(jnp.bfloat16)
    loss_bf = jax.block_until_ready(normalized_mse_loss(yt_bf, yp_bf))
    ref_bf = (jnp.mean((yt_bf.astype(jnp.float32) - yp_bf.astype(jnp.float32)) ** 2)
              / jnp.mean(yt_bf.astype(jnp.float32) ** 2))
    assert jnp.allclose(loss_bf, ref_bf, rtol=1e-2), (loss_bf, ref_bf)

    # Larger, non-block-aligned case exercising the masked last block and the
    # two-way parallel grid split (rows = 2400 > 2048).
    k3, k4 = jax.random.split(k2)
    yt_big = jax.random.normal(k3, (4, 8, 96, 100), dtype=jnp.float32)
    yp_big = jax.random.normal(k4, (4, 8, 96, 100), dtype=jnp.float32)
    loss_big = jax.block_until_ready(normalized_mse_loss(yt_big, yp_big))
    ref_big = jnp.mean((yt_big - yp_big) ** 2) / jnp.mean(yt_big ** 2)
    assert jnp.allclose(loss_big, ref_big, rtol=1e-4, atol=1e-6), (loss_big, ref_big)

    print("KERNEL_OK")
</pallas_src>

<mosaic_0001>
module attributes {stable_mosaic.version = 11 : i64} {
  func.func @kernel(%arg0: i32, %arg1: i32, %arg2: memref<16x128xf32, #tpu.memory_space<vmem>>, %arg3: memref<16x128xf32, #tpu.memory_space<vmem>>, %arg4: memref<1x8x128xf32, #tpu.memory_space<vmem>>, %arg5: memref<1x8x128xf32, #tpu.memory_space<vmem>>) attributes {dimension_semantics = [#tpu.dimension_semantics<parallel>, #tpu.dimension_semantics<arbitrary>], iteration_bounds = array<i64: 1, 1>, scalar_prefetch = 0 : i64, scratch_operands = 0 : i64, tpu.core_type = #tpu.core_type<tc>, window_params = [{transform_indices = @transform_0, window_bounds = array<i64: 16, 128>}, {transform_indices = @transform_1, window_bounds = array<i64: 16, 128>}, {transform_indices = @transform_2, window_bounds = array<i64: 1, 8, 128>}, {transform_indices = @transform_3, window_bounds = array<i64: 1, 8, 128>}]} {
    %c0_i32 = arith.constant 0 : i32
    %0 = arith.cmpi eq, %arg1, %c0_i32 : i32
    %1 = arith.extui %0 : i1 to i32
    %c0_i32_0 = arith.constant 0 : i32
    %2 = arith.cmpi ne, %1, %c0_i32_0 : i32
    scf.if %2 {
      %cst_17 = arith.constant 0.000000e+00 : f32
      %24 = vector.broadcast %cst_17 : f32 to vector<8x128xf32>
      %c0_18 = arith.constant 0 : index
      %c0_19 = arith.constant 0 : index
      %c0_20 = arith.constant 0 : index
      %25 = vector.load %arg4[%c0_18, %c0_19, %c0_20] : memref<1x8x128xf32, #tpu.memory_space<vmem>>, vector<1x8x128xf32>
      %26 = vector.shape_cast %25 : vector<1x8x128xf32> to vector<8x128xf32>
      %27 = vector.shape_cast %24 : vector<8x128xf32> to vector<1x8x128xf32>
      tpu.vector_store %arg4[%c0_18, %c0_19, %c0_20], %27 {strides = array<i32>} : memref<1x8x128xf32, #tpu.memory_space<vmem>>, vector<1x8x128xf32>,
      %cst_21 = arith.constant 0.000000e+00 : f32
      %28 = vector.broadcast %cst_21 : f32 to vector<8x128xf32>
      %c0_22 = arith.constant 0 : index
      %c0_23 = arith.constant 0 : index
      %c0_24 = arith.constant 0 : index
      %29 = vector.load %arg5[%c0_22, %c0_23, %c0_24] : memref<1x8x128xf32, #tpu.memory_space<vmem>>, vector<1x8x128xf32>
      %30 = vector.shape_cast %29 : vector<1x8x128xf32> to vector<8x128xf32>
      %31 = vector.shape_cast %28 : vector<8x128xf32> to vector<1x8x128xf32>
      tpu.vector_store %arg5[%c0_22, %c0_23, %c0_24], %31 {strides = array<i32>} : memref<1x8x128xf32, #tpu.memory_space<vmem>>, vector<1x8x128xf32>,
    } else {
    }
    %c0 = arith.constant 0 : index
    %c0_1 = arith.constant 0 : index
    %3 = vector.load %arg2[%c0, %c0_1] : memref<16x128xf32, #tpu.memory_space<vmem>>, vector<16x128xf32>
    %c0_2 = arith.constant 0 : index
    %c0_3 = arith.constant 0 : index
    %4 = vector.load %arg3[%c0_2, %c0_3] : memref<16x128xf32, #tpu.memory_space<vmem>>, vector<16x128xf32>
    %5 = arith.subf %3, %4 : vector<16x128xf32>
    %6 = arith.mulf %5, %5 : vector<16x128xf32>
    %7 = arith.mulf %3, %3 : vector<16x128xf32>
    %c0_4 = arith.constant 0 : index
    %c0_5 = arith.constant 0 : index
    %c0_6 = arith.constant 0 : index
    %8 = vector.load %arg4[%c0_4, %c0_5, %c0_6] : memref<1x8x128xf32, #tpu.memory_space<vmem>>, vector<1x8x128xf32>
    %9 = vector.shape_cast %8 : vector<1x8x128xf32> to vector<8x128xf32>
    %10 = vector.shape_cast %6 : vector<16x128xf32> to vector<2x8x128xf32>
    %cst = arith.constant dense<0.000000e+00> : vector<8x128xf32>
    %11 = vector.multi_reduction <add>, %10, %cst [0] : vector<2x8x128xf32> to vector<8x128xf32>
    %12 = arith.addf %9, %11 : vector<8x128xf32>
    %c0_7 = arith.constant 0 : index
    %c0_8 = arith.constant 0 : index
    %c0_9 = arith.constant 0 : index
    %13 = vector.load %arg4[%c0_7, %c0_8, %c0_9] : memref<1x8x128xf32, #tpu.memory_space<vmem>>, vector<1x8x128xf32>
    %14 = vector.shape_cast %13 : vector<1x8x128xf32> to vector<8x128xf32>
    %15 = vector.shape_cast %12 : vector<8x128xf32> to vector<1x8x128xf32>
    tpu.vector_store %arg4[%c0_7, %c0_8, %c0_9], %15 {strides = array<i32>} : memref<1x8x128xf32, #tpu.memory_space<vmem>>, vector<1x8x128xf32>,
    %c0_10 = arith.constant 0 : index
    %c0_11 = arith.constant 0 : index
    %c0_12 = arith.constant 0 : index
    %16 = vector.load %arg5[%c0_10, %c0_11, %c0_12] : memref<1x8x128xf32, #tpu.memory_space<vmem>>, vector<1x8x128xf32>
    %17 = vector.shape_cast %16 : vector<1x8x128xf32> to vector<8x128xf32>
    %18 = vector.shape_cast %7 : vector<16x128xf32> to vector<2x8x128xf32>
    %cst_13 = arith.constant dense<0.000000e+00> : vector<8x128xf32>
    %19 = vector.multi_reduction <add>, %18, %cst_13 [0] : vector<2x8x128xf32> to vector<8x128xf32>
    %20 = arith.addf %17, %19 : vector<8x128xf32>
    %c0_14 = arith.constant 0 : index
    %c0_15 = arith.constant 0 : index
    %c0_16 = arith.constant 0 : index
    %21 = vector.load %arg5[%c0_14, %c0_15, %c0_16] : memref<1x8x128xf32, #tpu.memory_space<vmem>>, vector<1x8x128xf32>
    %22 = vector.shape_cast %21 : vector<1x8x128xf32> to vector<8x128xf32>
    %23 = vector.shape_cast %20 : vector<8x128xf32> to vector<1x8x128xf32>
    tpu.vector_store %arg5[%c0_14, %c0_15, %c0_16], %23 {strides = array<i32>} : memref<1x8x128xf32, #tpu.memory_space<vmem>>, vector<1x8x128xf32>,
    return
  }
  func.func @transform_0(%arg0: i32, %arg1: i32) -> (i32, i32) {
    %c1_i32 = arith.constant 1 : i32
    %0 = arith.muli %arg0, %c1_i32 : i32
    %1 = arith.addi %0, %arg1 : i32
    %c0_i32 = arith.constant 0 : i32
    %2 = arith.minsi %1, %c0_i32 : i32
    %c0_i32_0 = arith.constant 0 : i32
    %c0_i32_1 = arith.constant 0 : i32
    return %2, %c0_i32_0 : i32, i32
  }
  func.func @transform_1(%arg0: i32, %arg1: i32) -> (i32, i32) {
    %c1_i32 = arith.constant 1 : i32
    %0 = arith.muli %arg0, %c1_i32 : i32
    %1 = arith.addi %0, %arg1 : i32
    %c0_i32 = arith.constant 0 : i32
    %2 = arith.minsi %1, %c0_i32 : i32
    %c0_i32_0 = arith.constant 0 : i32
    %c0_i32_1 = arith.constant 0 : i32
    return %2, %c0_i32_0 : i32, i32
  }
  func.func @transform_2(%arg0: i32, %arg1: i32) -> (i32, i32, i32) {
    %c0_i32 = arith.constant 0 : i32
    %c0_i32_0 = arith.constant 0 : i32
    %c0_i32_1 = arith.constant 0 : i32
    return %arg0, %c0_i32, %c0_i32_0 : i32, i32, i32
  }
  func.func @transform_3(%arg0: i32, %arg1: i32) -> (i32, i32, i32) {
    %c0_i32 = arith.constant 0 : i32
    %c0_i32_0 = arith.constant 0 : i32
    %c0_i32_1 = arith.constant 0 : i32
    return %arg0, %c0_i32, %c0_i32_0 : i32, i32, i32
  }
}

</mosaic_0001>

<llo_original>
// kernel: tpu_custom_call.1
$region0: #{tpu_custom_call.1}
  #allocation0 [shape = 'u32[]', space=smem, size = 0x4, offset = 0x4, fixed_abs, tag = 'smem constant byte address 0x4 - core index']
  #allocation1 [shape = 'u32[144,128]{1,0:T(1,128)}', space=vmem, size = 0x12000, scoped, tag = 'internal scratch']
  %s0 = inlined_call_operand.hbm [shape: f32[16,128], index: 0, kind: input, shape index: {}]
  %s1 = inlined_call_operand.hbm [shape: f32[16,128], index: 1, kind: input, shape index: {}]
  %s2 = inlined_call_operand.hbm [shape: f32[1,8,128], index: 2, kind: output, shape index: {0}]
  %s3 = inlined_call_operand.hbm [shape: f32[1,8,128], index: 3, kind: output, shape index: {1}]
  %4 = xla_tuple %s2, %s3
  %s5 = sld [smem:[#allocation0]]
  $region38: #{tpu_custom_call.1} parent=0
    _
  %s7 = ssub.s32 1, %s5
  %s8 = scalar_select 0, %s7, %s5
  $region1: #{tpu_custom_call.1} parent=0
    #allocation2 [shape = 'u8[8192]{0}', space=vmem, size = 0x2000, scoped, tag = 'input window, operand 0, single buffered']
    #allocation3 [shape = 's32[1]{0}', space=sflag, size = 0x4, scoped, tag = 'scoped memory for tpu_custom_call.1']
    #allocation4 [shape = 's32[1]{0}', space=sflag, size = 0x4, scoped, tag = 'scoped memory for tpu_custom_call.1']
    #allocation5 [shape = 'u8[8192]{0}', space=vmem, size = 0x2000, scoped, tag = 'input window, operand 1, single buffered']
    #allocation6 [shape = 's32[1]{0}', space=sflag, size = 0x4, scoped, tag = 'scoped memory for tpu_custom_call.1']
    #allocation7 [shape = 'u8[4096]{0}', space=vmem, size = 0x1000, scoped, tag = 'output window, operand 0, single buffered']
    #allocation8 [shape = 'u8[4096]{0}', space=vmem, size = 0x1000, scoped, tag = 'output window, operand 1, single buffered']
    #allocation9 [shape = 's32[1]{0}', space=sflag, size = 0x4, scoped, tag = 'scoped memory for tpu_custom_call.1']
    %9 = vsyncpa [#allocation3], 0
    %10 = vsyncpa [#allocation6], 0
    %11 = vsyncpa [#allocation4], 0
    %12 = vsyncpa [#allocation9], 0
    // Predicated region
    $region2: #{tpu_custom_call.1} parent=1 // pred_check
      _
    $region3: #{tpu_custom_call.1} parent=1 // pred_check_branch
      %14 = sbr.rel (0) target = $region5
    $region4: #{tpu_custom_call.1} parent=1 // pred_region
      %s15 = sadd.s32 0, 0
      %p16 = scmp.lt.s32.totalorder %s15, 0
      %s17 = scalar_select %p16, %s15, 0
      %s18 = smul.u32 2, %s17
      %s20 = ssub.s32 256, 256
      %21 = vsyncadd [#allocation3], %s20
      %s22 = smul.addr %s18, 128
      %s23 = scalar_lea.hbm %s0, %s22
      %s24 = sshll.u32 [#allocation2], 4
      %s25 = int_to_ptr.vmem [resolvable:$true] %s24
      %30 = dma.hbm_to_vmem [thread:$0]  %s23, 256, %s25, [#allocation3], 128, 128, 8
    $region5: #{tpu_custom_call.1} parent=1 // pred_fallthru
      _
    // Predicated region
    $region6: #{tpu_custom_call.1} parent=1 // pred_check
      _
    $region7: #{tpu_custom_call.1} parent=1 // pred_check_branch
      %32 = sbr.rel (0) target = $region9
    $region8: #{tpu_custom_call.1} parent=1 // pred_region
      %s33 = sadd.s32 0, 0
      %p34 = scmp.lt.s32.totalorder %s33, 0
      %s35 = scalar_select %p34, %s33, 0
      %s36 = smul.u32 2, %s35
      %s38 = ssub.s32 256, 256
      %39 = vsyncadd [#allocation6], %s38
      %s40 = smul.addr %s36, 128
      %s41 = scalar_lea.hbm %s1, %s40
      %s42 = sshll.u32 [#allocation5], 4
      %s43 = int_to_ptr.vmem [resolvable:$true] %s42
      %48 = dma.hbm_to_vmem [thread:$0]  %s41, 256, %s43, [#allocation6], 128, 128, 8
    $region9: #{tpu_custom_call.1} parent=1 // pred_fallthru
      _
    // Predicated region
    $region10: #{tpu_custom_call.1} parent=1 // pred_check
      _
    $region11: #{tpu_custom_call.1} parent=1 // pred_check_branch
      %50 = sbr.rel (0) target = $region13
    $region12: #{tpu_custom_call.1} parent=1 // pred_region
      %51 = dma.done [#allocation3], 256
    $region13: #{tpu_custom_call.1} parent=1 // pred_fallthru
      _
    // Predicated region
    $region14: #{tpu_custom_call.1} parent=1 // pred_check
      _
    $region15: #{tpu_custom_call.1} parent=1 // pred_check_branch
      %53 = sbr.rel (0) target = $region17
    $region16: #{tpu_custom_call.1} parent=1 // pred_region
      %54 = dma.done [#allocation6], 256
    $region17: #{tpu_custom_call.1} parent=1 // pred_fallthru
      _
    %s55 = sadd.s32 0, 0
    %p56 = scmp.lt.s32.totalorder %s55, 0
    %s57 = scalar_select %p56, %s55, 0
    %s58 = smul.u32 2, %s57
    %s59 = sadd.s32 0, 0
    %p60 = scmp.lt.s32.totalorder %s59, 0
    %s61 = scalar_select %p60, %s59, 0
    %s62 = smul.u32 2, %s61
    %p63 = scmp.eq.s32.totalorder 0, 0
    // Predicated region
    $region18: #{tpu_custom_call.1} parent=1 // pred_check
      %p64 = pneg %p63
    $region19: #{tpu_custom_call.1} parent=1 // pred_check_branch
      %66 = sbr.rel (%p64) target = $region21
    $region20: #{tpu_custom_call.1} parent=1 // pred_region
      %67 = vst [vmem:[#allocation7] sm:$0xff] 0.0
      %68 = vst [vmem:[#allocation8] sm:$0xff] 0.0
    $region21: #{tpu_custom_call.1} parent=1 // pred_fallthru
      _
    %v69 = vld [vmem:[#allocation2] sm:$0xff]
    %v70 = vld [vmem:[#allocation2 + $0x8] sm:$0xff]
    %v71 = vld [vmem:[#allocation5] sm:$0xff]
    %v72 = vld [vmem:[#allocation5 + $0x8] sm:$0xff]
    %v73 = vsub.f32 %v69, %v71
    %v74 = vsub.f32 %v70, %v72
    %v75 = vmul.f32 %v73, %v73
    %v76 = vmul.f32 %v74, %v74
    %v77 = vmul.f32 %v69, %v69
    %v78 = vmul.f32 %v70, %v70
    %v79 = vld [vmem:[#allocation7] sm:$0xff]
    %v80 = vadd.f32 %v75, %v76
    %v81 = vadd.f32 %v79, %v80
    %82 = vst [vmem:[#allocation7] sm:$0xff] %v81
    %v83 = vld [vmem:[#allocation8] sm:$0xff]
    %v84 = vadd.f32 %v77, %v78
    %v85 = vadd.f32 %v83, %v84
    %86 = vst [vmem:[#allocation8] sm:$0xff] %v85
    // Predicated region
    $region22: #{tpu_custom_call.1} parent=1 // pred_check
      _
    $region23: #{tpu_custom_call.1} parent=1 // pred_check_branch
      %88 = sbr.rel (0) target = $region25
    $region24: #{tpu_custom_call.1} parent=1 // pred_region
      %s90 = ssub.s32 128, 128
      %91 = vsyncadd [#allocation4], %s90
      %s93 = sshll.u32 [#allocation7], 4
      %s94 = int_to_ptr.vmem [resolvable:$true] %s93
      %96 = dma.vmem_to_hbm [thread:$0]  %s94, 128, %s2, [#allocation4]
    $region25: #{tpu_custom_call.1} parent=1 // pred_fallthru
      _
    // Predicated region
    $region26: #{tpu_custom_call.1} parent=1 // pred_check
      _
    $region27: #{tpu_custom_call.1} parent=1 // pred_check_branch
      %98 = sbr.rel (0) target = $region29
    $region28: #{tpu_custom_call.1} parent=1 // pred_region
      %s100 = ssub.s32 128, 128
      %101 = vsyncadd [#allocation9], %s100
      %s103 = sshll.u32 [#allocation8], 4
      %s104 = int_to_ptr.vmem [resolvable:$true] %s103
      %106 = dma.vmem_to_hbm [thread:$0]  %s104, 128, %s3, [#allocation9]
    $region29: #{tpu_custom_call.1} parent=1 // pred_fallthru
      _
    // Predicated region
    $region30: #{tpu_custom_call.1} parent=1 // pred_check
      _
    $region31: #{tpu_custom_call.1} parent=1 // pred_check_branch
      %108 = sbr.rel (0) target = $region33
    $region32: #{tpu_custom_call.1} parent=1 // pred_region
      %109 = dma.done [#allocation4], 128
    $region33: #{tpu_custom_call.1} parent=1 // pred_fallthru
      _
    // Predicated region
    $region34: #{tpu_custom_call.1} parent=1 // pred_check
      _
    $region35: #{tpu_custom_call.1} parent=1 // pred_check_branch
      %111 = sbr.rel (0) target = $region37
    $region36: #{tpu_custom_call.1} parent=1 // pred_region
      %112 = dma.done [#allocation9], 128
    $region37: #{tpu_custom_call.1} parent=1 // pred_fallthru
      _
    %113 = vsyncpa [#allocation3], 1
    %114 = vsyncpa [#allocation6], 1
    %115 = vsyncpa [#allocation4], 1
    %116 = vsyncpa [#allocation9], 1

</llo_original>
